<compile_context>
chip_gen: v5e
topology: v5e:2x2
jax: 0.10.0
libtpu: 0.0.40
codegen_flags: <defaults>
</compile_context>

<pallas_src>
import functools

import jax
import jax.numpy as jnp
from jax.experimental import pallas as pl
from jax.experimental.pallas import tpu as pltpu

EPS = 1e-5
LANE = 128


def _round_up(n, m):
    return ((n + m - 1) // m) * m


# ----------------------------------------------------------------------------
# One-time capability probes (run once, cached).
# ----------------------------------------------------------------------------
_BUFFERED1_SUPPORTED = None


def _buffered1_supported():
    """Probe whether pipeline_mode=pl.Buffered(1) lowers cleanly on this jax."""
    global _BUFFERED1_SUPPORTED
    if _BUFFERED1_SUPPORTED is not None:
        return _BUFFERED1_SUPPORTED

    def _copy(x_ref, o_ref):
        o_ref[...] = x_ref[...]

    try:
        spec = pl.BlockSpec((8, LANE), lambda i: (0, 0),
                            pipeline_mode=pl.Buffered(1))
        out = pl.pallas_call(
            _copy,
            out_shape=jax.ShapeDtypeStruct((8, LANE), jnp.float32),
            grid=(1,),
            in_specs=[spec],
            out_specs=spec,
        )(jnp.zeros((8, LANE), jnp.float32))
        jax.block_until_ready(out)
        _BUFFERED1_SUPPORTED = True
    except Exception:
        _BUFFERED1_SUPPORTED = False
    return _BUFFERED1_SUPPORTED


def _vmem_capacity_bytes():
    cap = 64 << 20  # conservative default = v7x per-TC VMEM
    try:
        info = pltpu.get_tpu_info()
        cap = int(getattr(info, "vmem_capacity_bytes", cap))
    except Exception:
        pass
    return cap


# ----------------------------------------------------------------------------
# Kernel body.
# ----------------------------------------------------------------------------
def _netwrapper_kernel(*refs, fuse_bias):
    if fuse_bias:
        (x_ref, w0_ref, wa_ref, g1_ref, be1_ref, wb_ref,
         proj_ref, rep_ref) = refs
        b0_ref = None
    else:
        (x_ref, w0_ref, b0_ref, wa_ref, g1_ref, be1_ref, wb_ref,
         proj_ref, rep_ref) = refs

    inv_b = jnp.float32(1.0 / x_ref.shape[0])

    # hooked backbone layer: Linear(in_dim, bb_dim).  Bias either fused via the
    # ones column in x / bias row in w0, or added on the VPU (free under MXU).
    rep = jnp.dot(x_ref[...], w0_ref[...], preferred_element_type=jnp.float32)
    if not fuse_bias:
        rep = rep + b0_ref[...]
    rep_ref[...] = rep.astype(rep_ref.dtype)  # lane-dense (B, bb_pad) store

    # projector Linear(bb_dim, hidden, bias=False): bf16 operands, f32 acc.
    z1 = jnp.dot(rep.astype(jnp.bfloat16), wa_ref[...],
                 preferred_element_type=jnp.float32)

    # BatchNorm1d(hidden), training mode, one-pass sum / sum-of-squares.
    # Padded hidden columns: z1==0, gamma==1, beta==0 => stay exactly 0.
    s1 = jnp.sum(z1, axis=0, keepdims=True)
    ss1 = jnp.sum(z1 * z1, axis=0, keepdims=True)
    mu1 = s1 * inv_b
    var1 = ss1 * inv_b - mu1 * mu1
    scale1 = jax.lax.rsqrt(var1 + EPS) * g1_ref[...]   # combined at (1, H)
    z1 = (z1 - mu1) * scale1 + be1_ref[...]
    z1 = jnp.maximum(z1, 0.0)                          # ReLU

    # projector Linear(hidden, proj, bias=False): bf16 operands, f32 acc.
    z2 = jnp.dot(z1.astype(jnp.bfloat16), wb_ref[...],
                 preferred_element_type=jnp.float32)

    # BatchNorm1d(proj, affine=False), training mode, one-pass stats.
    s2 = jnp.sum(z2, axis=0, keepdims=True)
    ss2 = jnp.sum(z2 * z2, axis=0, keepdims=True)
    mu2 = s2 * inv_b
    var2 = ss2 * inv_b - mu2 * mu2
    proj_ref[...] = ((z2 - mu2) * jax.lax.rsqrt(var2 + EPS)).astype(proj_ref.dtype)


# ----------------------------------------------------------------------------
# Forward builder: pads/casts parameters ONCE, returns a jitted forward(x).
# ----------------------------------------------------------------------------
def make_netwrapper_forward(w0, b0, wa, gamma1, beta1, wb,
                            *, first_matmul_bf16=False):
    in_dim, bb_dim = w0.shape
    hidden = wa.shape[1]
    proj_dim = wb.shape[1]

    bb_pad = _round_up(bb_dim, LANE)
    h_pad = _round_up(hidden, LANE)
    p_pad = _round_up(proj_dim, LANE)

    # Fuse the bias only when the +1 column does not add a 128-lane K slab.
    fuse_bias = _round_up(in_dim + 1, LANE) == _round_up(in_dim, LANE)
    in_pad = _round_up(in_dim + 1, LANE) if fuse_bias else _round_up(in_dim, LANE)

    first_dtype = jnp.bfloat16 if first_matmul_bf16 else jnp.float32
    first_itemsize = 2 if first_matmul_bf16 else 4

    # --- one-time, hoisted parameter padding / casting (eager, not per-call) --
    w0_p = (jnp.zeros((in_pad, bb_pad), first_dtype)
            .at[:in_dim, :bb_dim].set(w0.astype(first_dtype)))
    if fuse_bias:
        w0_p = w0_p.at[in_dim, :bb_dim].set(b0.reshape(-1).astype(first_dtype))
        bias_args = ()
    else:
        b0_p = (jnp.zeros((1, bb_pad), jnp.float32)
                .at[:, :bb_dim].set(b0.reshape(1, -1).astype(jnp.float32)))
        bias_args = (b0_p,)
    wa_p = (jnp.zeros((bb_pad, h_pad), jnp.bfloat16)
            .at[:bb_dim, :hidden].set(wa.astype(jnp.bfloat16)))
    g1_p = (jnp.ones((1, h_pad), jnp.float32)          # pad gamma with ones!
            .at[:, :hidden].set(gamma1.reshape(1, -1).astype(jnp.float32)))
    be1_p = (jnp.zeros((1, h_pad), jnp.float32)
             .at[:, :hidden].set(beta1.reshape(1, -1).astype(jnp.float32)))
    wb_p = (jnp.zeros((h_pad, p_pad), jnp.bfloat16)
            .at[:hidden, :proj_dim].set(wb.astype(jnp.bfloat16)))
    params = (w0_p,) + bias_args + (wa_p, g1_p, be1_p, wb_p)
    jax.block_until_ready(params)

    use_buffered = _buffered1_supported()
    vmem_cap = (3 * _vmem_capacity_bytes()) // 4        # gen-aware headroom
    kernel = functools.partial(_netwrapper_kernel, fuse_bias=fuse_bias)

    def full(shape):
        if use_buffered:
            # grid=(1,): no pipelining possible, so single-buffer every block.
            return pl.BlockSpec(shape, lambda *_: (0,) * len(shape),
                                pipeline_mode=pl.Buffered(1))
        return pl.BlockSpec(shape, lambda *_: (0,) * len(shape))

    @jax.jit
    def forward(x):
        B = x.shape[0]
        xc = x.astype(first_dtype)
        pad_cols = in_pad - in_dim
        if fuse_bias:
            pieces = [xc, jnp.ones((B, 1), first_dtype)]
            if pad_cols > 1:
                pieces.append(jnp.zeros((B, pad_cols - 1), first_dtype))
            x_p = jnp.concatenate(pieces, axis=1)
        else:
            x_p = jnp.pad(xc, ((0, 0), (0, pad_cols))) if pad_cols else xc

        # Explicit VMEM budget: single- or double-buffered I/O + f32 scratch.
        in_bytes = ((x_p.size + w0_p.size) * first_itemsize
                    + (g1_p.size + be1_p.size) * 4
                    + (wa_p.size + wb_p.size) * 2
                    + (0 if fuse_bias else bb_pad * 4))
        out_bytes = (B * p_pad + B * bb_pad) * 4
        scratch_bytes = 8 * B * max(bb_pad, h_pad, p_pad) * 4
        bufs = 1 if use_buffered else 2
        vmem_limit = int(min(max(bufs * (in_bytes + out_bytes)
                                 + scratch_bytes + (2 << 20), 4 << 20),
                             vmem_cap))

        in_specs = [full((B, in_pad)), full((in_pad, bb_pad))]
        if not fuse_bias:
            in_specs.append(full((1, bb_pad)))
        in_specs += [full((bb_pad, h_pad)), full((1, h_pad)),
                     full((1, h_pad)), full((h_pad, p_pad))]

        proj_p, rep_p = pl.pallas_call(
            kernel,
            out_shape=(
                jax.ShapeDtypeStruct((B, p_pad), jnp.float32),
                jax.ShapeDtypeStruct((B, bb_pad), jnp.float32),
            ),
            grid_spec=pltpu.PrefetchScalarGridSpec(
                num_scalar_prefetch=0,
                grid=(1,),
                in_specs=in_specs,
                out_specs=[full((B, p_pad)), full((B, bb_pad))],
            ),
            compiler_params=pltpu.CompilerParams(
                dimension_semantics=("arbitrary",),
                vmem_limit_bytes=vmem_limit),
        )(x_p, *params)

        # Strip lane padding outside the kernel.
        return proj_p[:, :proj_dim], rep_p[:, :bb_dim]

    return forward


# ----------------------------------------------------------------------------
# Pure-JAX reference mirroring the kernel's bf16-operand projector matmuls.
# ----------------------------------------------------------------------------
def _reference(x, w0, b0, wa, gamma1, beta1, wb):
    bf = lambda a: a.astype(jnp.bfloat16).astype(jnp.float32)
    rep = x @ w0 + b0
    z1 = bf(rep) @ bf(wa)
    mu1 = z1.mean(0, keepdims=True)
    var1 = ((z1 - mu1) ** 2).mean(0, keepdims=True)
    z1 = (z1 - mu1) / jnp.sqrt(var1 + EPS) * gamma1 + beta1
    z1 = jnp.maximum(z1, 0.0)
    z2 = bf(z1) @ bf(wb)
    mu2 = z2.mean(0, keepdims=True)
    var2 = ((z2 - mu2) ** 2).mean(0, keepdims=True)
    proj = (z2 - mu2) / jnp.sqrt(var2 + EPS)
    return proj, rep


if __name__ == "__main__":
    # small shapes: batch=8, input=16, bb_dim=64, projection_hidden_size=32,
    # projection_size=16
    B, in_dim, bb_dim, hidden, proj_dim = 8, 16, 64, 32, 16

    key = jax.random.PRNGKey(0)
    k_x, k_w0, k_b0, k_wa, k_wb = jax.random.split(key, 5)

    x = jax.random.normal(k_x, (B, in_dim), dtype=jnp.float32)

    # deterministic synthetic parameters (PyTorch Linear weight (out,in) stored
    # transposed as (in,out) so activations compute x @ W).
    w0 = jax.random.normal(k_w0, (in_dim, bb_dim), dtype=jnp.float32) * 0.1
    b0 = jax.random.normal(k_b0, (1, bb_dim), dtype=jnp.float32) * 0.1
    wa = jax.random.normal(k_wa, (bb_dim, hidden), dtype=jnp.float32) * 0.1
    gamma1 = jnp.ones((1, hidden), dtype=jnp.float32)   # BatchNorm1d init
    beta1 = jnp.zeros((1, hidden), dtype=jnp.float32)
    wb = jax.random.normal(k_wb, (hidden, proj_dim), dtype=jnp.float32) * 0.1

    # Padding / casting happens exactly once here, not per forward call.
    forward = make_netwrapper_forward(w0, b0, wa, gamma1, beta1, wb,
                                      first_matmul_bf16=False)

    projection, representation = forward(x)
    jax.block_until_ready((projection, representation))
    # Second call re-uses the compiled executable and pre-padded params.
    projection, representation = forward(x)
    jax.block_until_ready((projection, representation))

    proj_ref, rep_ref = _reference(x, w0, b0, wa, gamma1, beta1, wb)
    assert projection.shape == (B, proj_dim)
    assert representation.shape == (B, bb_dim)
    assert jnp.allclose(representation, rep_ref, atol=1e-4, rtol=1e-4)
    assert jnp.allclose(projection, proj_ref, atol=2e-3, rtol=2e-3)

    print("KERNEL_OK")
</pallas_src>

<mosaic_0001>
module attributes {stable_mosaic.version = 11 : i64} {
  func.func @_copy(%arg0: i32, %arg1: memref<8x128xf32, #tpu.memory_space<vmem>>, %arg2: memref<8x128xf32, #tpu.memory_space<vmem>>) attributes {dimension_semantics = [#tpu.dimension_semantics<arbitrary>], iteration_bounds = array<i64: 1>, scalar_prefetch = 0 : i64, scratch_operands = 0 : i64, tpu.core_type = #tpu.core_type<tc>, window_params = [{pipeline_mode = #tpu.pipeline_mode<synchronous>, transform_indices = @transform_0, window_bounds = array<i64: 8, 128>}, {pipeline_mode = #tpu.pipeline_mode<synchronous>, transform_indices = @transform_1, window_bounds = array<i64: 8, 128>}]} {
    %c0 = arith.constant 0 : index
    %c0_0 = arith.constant 0 : index
    %0 = vector.load %arg1[%c0, %c0_0] : memref<8x128xf32, #tpu.memory_space<vmem>>, vector<8x128xf32>
    %c0_1 = arith.constant 0 : index
    %c0_2 = arith.constant 0 : index
    %1 = vector.load %arg2[%c0_1, %c0_2] : memref<8x128xf32, #tpu.memory_space<vmem>>, vector<8x128xf32>
    tpu.vector_store %arg2[%c0_1, %c0_2], %0 {strides = array<i32>} : memref<8x128xf32, #tpu.memory_space<vmem>>, vector<8x128xf32>,
    return
  }
  func.func @transform_0(%arg0: i32) -> (i32, i32) {
    %c0_i32 = arith.constant 0 : i32
    %c0_i32_0 = arith.constant 0 : i32
    %c0_i32_1 = arith.constant 0 : i32
    return %c0_i32, %c0_i32_0 : i32, i32
  }
  func.func @transform_1(%arg0: i32) -> (i32, i32) {
    %c0_i32 = arith.constant 0 : i32
    %c0_i32_0 = arith.constant 0 : i32
    %c0_i32_1 = arith.constant 0 : i32
    return %c0_i32, %c0_i32_0 : i32, i32
  }
}

module attributes {stable_mosaic.version = 11 : i64} {
  func.func @_netwrapper_kernel(%arg0: i32, %arg1: memref<8x128xf32, #tpu.memory_space<vmem>>, %arg2: memref<128x128xf32, #tpu.memory_space<vmem>>, %arg3: memref<128x128xbf16, #tpu.memory_space<vmem>>, %arg4: memref<1x128xf32, #tpu.memory_space<vmem>>, %arg5: memref<1x128xf32, #tpu.memory_space<vmem>>, %arg6: memref<128x128xbf16, #tpu.memory_space<vmem>>, %arg7: memref<8x128xf32, #tpu.memory_space<vmem>>, %arg8: memref<8x128xf32, #tpu.memory_space<vmem>>) attributes {dimension_semantics = [#tpu.dimension_semantics<arbitrary>], iteration_bounds = array<i64: 1>, scalar_prefetch = 0 : i64, scratch_operands = 0 : i64, tpu.core_type = #tpu.core_type<tc>, window_params = [{pipeline_mode = #tpu.pipeline_mode<synchronous>, transform_indices = @transform_0, window_bounds = array<i64: 8, 128>}, {pipeline_mode = #tpu.pipeline_mode<synchronous>, transform_indices = @transform_1, window_bounds = array<i64: 128, 128>}, {pipeline_mode = #tpu.pipeline_mode<synchronous>, transform_indices = @transform_2, window_bounds = array<i64: 128, 128>}, {pipeline_mode = #tpu.pipeline_mode<synchronous>, transform_indices = @transform_3, window_bounds = array<i64: 1, 128>}, {pipeline_mode = #tpu.pipeline_mode<synchronous>, transform_indices = @transform_4, window_bounds = array<i64: 1, 128>}, {pipeline_mode = #tpu.pipeline_mode<synchronous>, transform_indices = @transform_5, window_bounds = array<i64: 128, 128>}, {pipeline_mode = #tpu.pipeline_mode<synchronous>, transform_indices = @transform_6, window_bounds = array<i64: 8, 128>}, {pipeline_mode = #tpu.pipeline_mode<synchronous>, transform_indices = @transform_7, window_bounds = array<i64: 8, 128>}]} {
    %c0 = arith.constant 0 : index
    %c0_0 = arith.constant 0 : index
    %0 = vector.load %arg1[%c0, %c0_0] : memref<8x128xf32, #tpu.memory_space<vmem>>, vector<8x128xf32>
    %c0_1 = arith.constant 0 : index
    %c0_2 = arith.constant 0 : index
    %1 = vector.load %arg2[%c0_1, %c0_2] : memref<128x128xf32, #tpu.memory_space<vmem>>, vector<128x128xf32>
    %cst = arith.constant dense<0.000000e+00> : vector<8x128xf32>
    %2 = tpu.matmul %0, %1, %cst {dimension_numbers = #tpu.dot_dimension_numbers<[1], [0], [0], [1], [0, 0, 1, 1], [], []>} : vector<8x128xf32>, vector<128x128xf32>, vector<8x128xf32> -> vector<8x128xf32>
    %c0_3 = arith.constant 0 : index
    %c0_4 = arith.constant 0 : index
    %3 = vector.load %arg8[%c0_3, %c0_4] : memref<8x128xf32, #tpu.memory_space<vmem>>, vector<8x128xf32>
    tpu.vector_store %arg8[%c0_3, %c0_4], %2 {strides = array<i32>} : memref<8x128xf32, #tpu.memory_space<vmem>>, vector<8x128xf32>,
    %4 = arith.truncf %2 : vector<8x128xf32> to vector<8x128xbf16>
    %c0_5 = arith.constant 0 : index
    %c0_6 = arith.constant 0 : index
    %5 = vector.load %arg3[%c0_5, %c0_6] : memref<128x128xbf16, #tpu.memory_space<vmem>>, vector<128x128xbf16>
    %cst_7 = arith.constant dense<0.000000e+00> : vector<8x128xf32>
    %6 = tpu.matmul %4, %5, %cst_7 {dimension_numbers = #tpu.dot_dimension_numbers<[1], [0], [0], [1], [0, 0, 1, 1], [], []>} : vector<8x128xbf16>, vector<128x128xbf16>, vector<8x128xf32> -> vector<8x128xf32>
    %cst_8 = arith.constant dense<0.000000e+00> : vector<128xf32>
    %7 = vector.multi_reduction <add>, %6, %cst_8 [0] : vector<8x128xf32> to vector<128xf32>
    %8 = vector.shape_cast %7 : vector<128xf32> to vector<1x128xf32>
    %9 = arith.mulf %6, %6 : vector<8x128xf32>
    %cst_9 = arith.constant dense<0.000000e+00> : vector<128xf32>
    %10 = vector.multi_reduction <add>, %9, %cst_9 [0] : vector<8x128xf32> to vector<128xf32>
    %11 = vector.shape_cast %10 : vector<128xf32> to vector<1x128xf32>
    %cst_10 = arith.constant 1.250000e-01 : f32
    %12 = vector.broadcast %cst_10 : f32 to vector<1x128xf32>
    %13 = arith.mulf %8, %12 : vector<1x128xf32>
    %cst_11 = arith.constant 1.250000e-01 : f32
    %14 = vector.broadcast %cst_11 : f32 to vector<1x128xf32>
    %15 = arith.mulf %11, %14 : vector<1x128xf32>
    %16 = arith.mulf %13, %13 : vector<1x128xf32>
    %17 = arith.subf %15, %16 : vector<1x128xf32>
    %cst_12 = arith.constant 9.99999974E-6 : f32
    %18 = vector.broadcast %cst_12 : f32 to vector<1x128xf32>
    %19 = arith.addf %17, %18 : vector<1x128xf32>
    %20 = math.rsqrt %19 : vector<1x128xf32>
    %c0_13 = arith.constant 0 : index
    %c0_14 = arith.constant 0 : index
    %21 = vector.load %arg4[%c0_13, %c0_14] : memref<1x128xf32, #tpu.memory_space<vmem>>, vector<1x128xf32>
    %22 = arith.mulf %20, %21 : vector<1x128xf32>
    %23 = vector.broadcast %13 : vector<1x128xf32> to vector<8x128xf32>
    %24 = arith.subf %6, %23 : vector<8x128xf32>
    %25 = vector.broadcast %22 : vector<1x128xf32> to vector<8x128xf32>
    %26 = arith.mulf %24, %25 : vector<8x128xf32>
    %c0_15 = arith.constant 0 : index
    %c0_16 = arith.constant 0 : index
    %27 = vector.load %arg5[%c0_15, %c0_16] : memref<1x128xf32, #tpu.memory_space<vmem>>, vector<1x128xf32>
    %28 = vector.broadcast %27 : vector<1x128xf32> to vector<8x128xf32>
    %29 = arith.addf %26, %28 : vector<8x128xf32>
    %cst_17 = arith.constant 0.000000e+00 : f32
    %30 = vector.broadcast %cst_17 : f32 to vector<8x128xf32>
    %31 = arith.maximumf %29, %30 : vector<8x128xf32>
    %32 = arith.truncf %31 : vector<8x128xf32> to vector<8x128xbf16>
    %c0_18 = arith.constant 0 : index
    %c0_19 = arith.constant 0 : index
    %33 = vector.load %arg6[%c0_18, %c0_19] : memref<128x128xbf16, #tpu.memory_space<vmem>>, vector<128x128xbf16>
    %cst_20 = arith.constant dense<0.000000e+00> : vector<8x128xf32>
    %34 = tpu.matmul %32, %33, %cst_20 {dimension_numbers = #tpu.dot_dimension_numbers<[1], [0], [0], [1], [0, 0, 1, 1], [], []>} : vector<8x128xbf16>, vector<128x128xbf16>, vector<8x128xf32> -> vector<8x128xf32>
    %cst_21 = arith.constant dense<0.000000e+00> : vector<128xf32>
    %35 = vector.multi_reduction <add>, %34, %cst_21 [0] : vector<8x128xf32> to vector<128xf32>
    %36 = vector.shape_cast %35 : vector<128xf32> to vector<1x128xf32>
    %37 = arith.mulf %34, %34 : vector<8x128xf32>
    %cst_22 = arith.constant dense<0.000000e+00> : vector<128xf32>
    %38 = vector.multi_reduction <add>, %37, %cst_22 [0] : vector<8x128xf32> to vector<128xf32>
    %39 = vector.shape_cast %38 : vector<128xf32> to vector<1x128xf32>
    %cst_23 = arith.constant 1.250000e-01 : f32
    %40 = vector.broadcast %cst_23 : f32 to vector<1x128xf32>
    %41 = arith.mulf %36, %40 : vector<1x128xf32>
    %cst_24 = arith.constant 1.250000e-01 : f32
    %42 = vector.broadcast %cst_24 : f32 to vector<1x128xf32>
    %43 = arith.mulf %39, %42 : vector<1x128xf32>
    %44 = arith.mulf %41, %41 : vector<1x128xf32>
    %45 = arith.subf %43, %44 : vector<1x128xf32>
    %46 = vector.broadcast %41 : vector<1x128xf32> to vector<8x128xf32>
    %47 = arith.subf %34, %46 : vector<8x128xf32>
    %cst_25 = arith.constant 9.99999974E-6 : f32
    %48 = vector.broadcast %cst_25 : f32 to vector<1x128xf32>
    %49 = arith.addf %45, %48 : vector<1x128xf32>
    %50 = math.rsqrt %49 : vector<1x128xf32>
    %51 = vector.broadcast %50 : vector<1x128xf32> to vector<8x128xf32>
    %52 = arith.mulf %47, %51 : vector<8x128xf32>
    %c0_26 = arith.constant 0 : index
    %c0_27 = arith.constant 0 : index
    %53 = vector.load %arg7[%c0_26, %c0_27] : memref<8x128xf32, #tpu.memory_space<vmem>>, vector<8x128xf32>
    tpu.vector_store %arg7[%c0_26, %c0_27], %52 {strides = array<i32>} : memref<8x128xf32, #tpu.memory_space<vmem>>, vector<8x128xf32>,
    return
  }
  func.func @transform_0(%arg0: i32) -> (i32, i32) {
    %c0_i32 = arith.constant 0 : i32
    %c0_i32_0 = arith.constant 0 : i32
    %c0_i32_1 = arith.constant 0 : i32
    return %c0_i32, %c0_i32_0 : i32, i32
  }
  func.func @transform_1(%arg0: i32) -> (i32, i32) {
    %c0_i32 = arith.constant 0 : i32
    %c0_i32_0 = arith.constant 0 : i32
    %c0_i32_1 = arith.constant 0 : i32
    return %c0_i32, %c0_i32_0 : i32, i32
  }
  func.func @transform_2(%arg0: i32) -> (i32, i32) {
    %c0_i32 = arith.constant 0 : i32
    %c0_i32_0 = arith.constant 0 : i32
    %c0_i32_1 = arith.constant 0 : i32
    return %c0_i32, %c0_i32_0 : i32, i32
  }
  func.func @transform_3(%arg0: i32) -> (i32, i32) {
    %c0_i32 = arith.constant 0 : i32
    %c0_i32_0 = arith.constant 0 : i32
    %c0_i32_1 = arith.constant 0 : i32
    return %c0_i32, %c0_i32_0 : i32, i32
  }
  func.func @transform_4(%arg0: i32) -> (i32, i32) {
    %c0_i32 = arith.constant 0 : i32
    %c0_i32_0 = arith.constant 0 : i32
    %c0_i32_1 = arith.constant 0 : i32
    return %c0_i32, %c0_i32_0 : i32, i32
  }
  func.func @transform_5(%arg0: i32) -> (i32, i32) {
    %c0_i32 = arith.constant 0 : i32
    %c0_i32_0 = arith.constant 0 : i32
    %c0_i32_1 = arith.constant 0 : i32
    return %c0_i32, %c0_i32_0 : i32, i32
  }
  func.func @transform_6(%arg0: i32) -> (i32, i32) {
    %c0_i32 = arith.constant 0 : i32
    %c0_i32_0 = arith.constant 0 : i32
    %c0_i32_1 = arith.constant 0 : i32
    return %c0_i32, %c0_i32_0 : i32, i32
  }
  func.func @transform_7(%arg0: i32) -> (i32, i32) {
    %c0_i32 = arith.constant 0 : i32
    %c0_i32_0 = arith.constant 0 : i32
    %c0_i32_1 = arith.constant 0 : i32
    return %c0_i32, %c0_i32_0 : i32, i32
  }
}

</mosaic_0001>

<llo_original>
// kernel: tpu_custom_call.1
$region0: #{tpu_custom_call.1}
  #allocation0 [shape = 'u32[]', space=smem, size = 0x4, offset = 0x4, fixed_abs, tag = 'smem constant byte address 0x4 - core index']
  #allocation1 [shape = 'u32[72,128]{1,0:T(1,128)}', space=vmem, size = 0x9000, scoped, tag = 'internal scratch']
  %s0 = inlined_call_operand.hbm [shape: f32[8,128], index: 0, kind: input, shape index: {}]
  %s1 = inlined_call_operand.hbm [shape: f32[8,128], index: 1, kind: output, shape index: {}]
  %s2 = sld [smem:[#allocation0]]
  $region18: #{tpu_custom_call.1} parent=0
    _
  %s4 = ssub.s32 1, %s2
  %s5 = scalar_select 0, %s4, %s2
  $region1: #{tpu_custom_call.1} parent=0
    #allocation2 [shape = 'u8[4096]{0}', space=vmem, size = 0x1000, scoped, tag = 'input window, operand 0, single buffered']
    #allocation3 [shape = 's32[1]{0}', space=sflag, size = 0x4, scoped, tag = 'scoped memory for tpu_custom_call.1']
    #allocation4 [shape = 's32[1]{0}', space=sflag, size = 0x4, scoped, tag = 'scoped memory for tpu_custom_call.1']
    #allocation5 [shape = 'u8[4096]{0}', space=vmem, size = 0x1000, scoped, tag = 'output window, operand 0, single buffered']
    %6 = vsyncpa [#allocation3], 0
    %7 = vsyncpa [#allocation4], 0
    // Predicated region
    $region2: #{tpu_custom_call.1} parent=1 // pred_check
      _
    $region3: #{tpu_custom_call.1} parent=1 // pred_check_branch
      %9 = sbr.rel (0) target = $region5
    $region4: #{tpu_custom_call.1} parent=1 // pred_region
      %11 = vsyncadd [#allocation3], 0
      %s13 = sshll.u32 %s0, 4
      %s14 = int_to_ptr.hbm [resolvable:$true] %s13
      %s15 = sshll.u32 [#allocation2], 4
      %s16 = int_to_ptr.vmem [resolvable:$true] %s15
      %18 = dma.hbm_to_vmem [thread:$0]  %s14, 128, %s16, [#allocation3]
    $region5: #{tpu_custom_call.1} parent=1 // pred_fallthru
      _
    // Predicated region
    $region6: #{tpu_custom_call.1} parent=1 // pred_check
      _
    $region7: #{tpu_custom_call.1} parent=1 // pred_check_branch
      %20 = sbr.rel (0) target = $region9
    $region8: #{tpu_custom_call.1} parent=1 // pred_region
      %22 = dma.done [#allocation3], 128
    $region9: #{tpu_custom_call.1} parent=1 // pred_fallthru
      _
    %v23 = vld [vmem:[#allocation2] sm:$0xff]
    %24 = vst [vmem:[#allocation5] sm:$0xff] %v23
    // Predicated region
    $region10: #{tpu_custom_call.1} parent=1 // pred_check
      _
    $region11: #{tpu_custom_call.1} parent=1 // pred_check_branch
      %26 = sbr.rel (0) target = $region13
    $region12: #{tpu_custom_call.1} parent=1 // pred_region
      %28 = vsyncadd [#allocation4], 0
      %s30 = sshll.u32 [#allocation5], 4
      %s31 = int_to_ptr.vmem [resolvable:$true] %s30
      %s32 = sshll.u32 %s1, 4
      %s33 = int_to_ptr.hbm [resolvable:$true] %s32
      %35 = dma.vmem_to_hbm [thread:$0]  %s31, 128, %s33, [#allocation4]
    $region13: #{tpu_custom_call.1} parent=1 // pred_fallthru
      _
    // Predicated region
    $region14: #{tpu_custom_call.1} parent=1 // pred_check
      _
    $region15: #{tpu_custom_call.1} parent=1 // pred_check_branch
      %37 = sbr.rel (0) target = $region17
    $region16: #{tpu_custom_call.1} parent=1 // pred_region
      %39 = dma.done [#allocation4], 128
    $region17: #{tpu_custom_call.1} parent=1 // pred_fallthru
      _
    %40 = vsyncpa [#allocation3], 1
    %41 = vsyncpa [#allocation4], 1

// kernel: forward.1
$region0: #{forward.1}
  #allocation0 [shape = 'u32[]', space=smem, size = 0x4, offset = 0x4, fixed_abs, tag = 'smem constant byte address 0x4 - core index']
  #allocation1 [shape = 'u32[72,128]{1,0:T(1,128)}', space=vmem, size = 0x9000, scoped, tag = 'internal scratch']
  %s0 = inlined_call_operand.vmem [shape: f32[8,128], index: 0, kind: input, shape index: {}]
  %s1 = inlined_call_operand.hbm [shape: f32[128,128], index: 1, kind: input, shape index: {}]
  %s2 = inlined_call_operand.hbm [shape: bf16[128,128], index: 2, kind: input, shape index: {}]
  %s3 = inlined_call_operand.vmem [shape: f32[1,128], index: 3, kind: input, shape index: {}]
  %s4 = inlined_call_operand.vmem [shape: f32[1,128], index: 4, kind: input, shape index: {}]
  %s5 = inlined_call_operand.hbm [shape: bf16[128,128], index: 5, kind: input, shape index: {}]
  %s6 = inlined_call_operand.hbm [shape: f32[8,128], index: 6, kind: output, shape index: {0}]
  %s7 = inlined_call_operand.hbm [shape: f32[8,128], index: 7, kind: output, shape index: {1}]
  %8 = xla_tuple %s6, %s7
  %s9 = sld [smem:[#allocation0]]
  $region54: #{forward.1} parent=0
    _
  %s11 = ssub.s32 1, %s9
  %s12 = scalar_select 0, %s11, %s9
  $region1: #{forward.1} parent=0
    #allocation2 [shape = 'u8[65536]{0}', space=vmem, size = 0x10000, scoped, tag = 'input window, operand 1, single buffered']
    #allocation3 [shape = 's32[1]{0}', space=sflag, size = 0x4, scoped, tag = 'scoped memory for forward.1']
    #allocation4 [shape = 's32[1]{0}', space=sflag, size = 0x4, scoped, tag = 'scoped memory for forward.1']
    #allocation5 [shape = 'u8[32768]{0}', space=vmem, size = 0x8000, scoped, tag = 'input window, operand 2, single buffered']
    #allocation6 [shape = 's32[1]{0}', space=sflag, size = 0x4, scoped, tag = 'scoped memory for forward.1']
    #allocation7 [shape = 'u8[32768]{0}', space=vmem, size = 0x8000, scoped, tag = 'input window, operand 5, single buffered']
    #allocation8 [shape = 'u8[4096]{0}', space=vmem, size = 0x1000, scoped, tag = 'output window, operand 0, single buffered']
    #allocation9 [shape = 'u8[4096]{0}', space=vmem, size = 0x1000, scoped, tag = 'output window, operand 1, single buffered']
    #allocation10 [shape = 's32[1]{0}', space=sflag, size = 0x4, scoped, tag = 'scoped memory for forward.1']
    %13 = vsyncpa [#allocation3], 0
    %14 = vsyncpa [#allocation6], 0
    %15 = vsyncpa [#allocation4], 0
    %16 = vsyncpa [#allocation10], 0
    // Predicated region
    $region2: #{forward.1} parent=1 // pred_check
      _
    $region3: #{forward.1} parent=1 // pred_check_branch
      %18 = sbr.rel (0) target = $region5
    $region4: #{forward.1} parent=1 // pred_region
      _
    $region5: #{forward.1} parent=1 // pred_fallthru
      _
    // Predicated region
    $region6: #{forward.1} parent=1 // pred_check
      _
    $region7: #{forward.1} parent=1 // pred_check_branch
      %20 = sbr.rel (0) target = $region9
    $region8: #{forward.1} parent=1 // pred_region
      %22 = vsyncadd [#allocation3], 0
      %s23 = sshll.u32 %s1, 4
      %s24 = int_to_ptr.hbm [resolvable:$true] %s23
      %s25 = sshll.u32 [#allocation2], 4
      %s26 = int_to_ptr.vmem [resolvable:$true] %s25
      %31 = dma.hbm_to_vmem [thread:$0]  %s24, 2048, %s26, [#allocation3], 128, 128, 8
    $region9: #{forward.1} parent=1 // pred_fallthru
      _
    // Predicated region
    $region10: #{forward.1} parent=1 // pred_check
      _
    $region11: #{forward.1} parent=1 // pred_check_branch
      %33 = sbr.rel (0) target = $region13
    $region12: #{forward.1} parent=1 // pred_region
      %35 = vsyncadd [#allocation6], 0
      %s36 = sshll.u32 %s2, 4
      %s37 = int_to_ptr.hbm [resolvable:$true] %s36
      %s38 = sshll.u32 [#allocation5], 4
      %s39 = int_to_ptr.vmem [resolvable:$true] %s38
      %44 = dma.hbm_to_vmem [thread:$0]  %s37, 1024, %s39, [#allocation6], 64, 64, 4
    $region13: #{forward.1} parent=1 // pred_fallthru
      _
    // Predicated region
    $region14: #{forward.1} parent=1 // pred_check
      _
    $region15: #{forward.1} parent=1 // pred_check_branch
      %46 = sbr.rel (0) target = $region17
    $region16: #{forward.1} parent=1 // pred_region
      _
    $region17: #{forward.1} parent=1 // pred_fallthru
      _
    // Predicated region
    $region18: #{forward.1} parent=1 // pred_check
      _
    $region19: #{forward.1} parent=1 // pred_check_branch
      %48 = sbr.rel (0) target = $region21
    $region20: #{forward.1} parent=1 // pred_region
      _
    $region21: #{forward.1} parent=1 // pred_fallthru
      _
    // Predicated region
    $region22: #{forward.1} parent=1 // pred_check
      _
    $region23: #{forward.1} parent=1 // pred_check_branch
      %50 = sbr.rel (0) target = $region25
    $region24: #{forward.1} parent=1 // pred_region
      %52 = vsyncadd [#allocation6], 0
      %s53 = sshll.u32 %s5, 4
      %s54 = int_to_ptr.hbm [resolvable:$true] %s53
      %s55 = sshll.u32 [#allocation7], 4
      %s56 = int_to_ptr.vmem [resolvable:$true] %s55
      %61 = dma.hbm_to_vmem [thread:$0]  %s54, 1024, %s56, [#allocation6], 64, 64, 4
    $region25: #{forward.1} parent=1 // pred_fallthru
      _
    // Predicated region
    $region26: #{forward.1} parent=1 // pred_check
      _
    $region27: #{forward.1} parent=1 // pred_check_branch
      %63 = sbr.rel (0) target = $region29
    $region28: #{forward.1} parent=1 // pred_region
      %65 = dma.done [#allocation3], 2048
    $region29: #{forward.1} parent=1 // pred_fallthru
      _
    // Predicated region
    $region30: #{forward.1} parent=1 // pred_check
      _
    $region31: #{forward.1} parent=1 // pred_check_branch
      %67 = sbr.rel (0) target = $region33
    $region32: #{forward.1} parent=1 // pred_region
      %69 = dma.done [#allocation6], 1024
    $region33: #{forward.1} parent=1 // pred_fallthru
      _
    // Predicated region
    $region34: #{forward.1} parent=1 // pred_check
      _
    $region35: #{forward.1} parent=1 // pred_check_branch
      %71 = sbr.rel (0) target = $region37
    $region36: #{forward.1} parent=1 // pred_region
      %73 = dma.done [#allocation6], 1024
    $region37: #{forward.1} parent=1 // pred_fallthru
      _
    %v74 = vld [vmem:[%s0] sm:$0xff]
    %v75 = vld [vmem:[#allocation2] sm:$0xff]
    %v76 = vld [vmem:[#allocation2 + $0x8] sm:$0xff]
    %v77 = vld [vmem:[#allocation2 + $0x10] sm:$0xff]
    %v78 = vld [vmem:[#allocation2 + $0x18] sm:$0xff]
    %v79 = vld [vmem:[#allocation2 + $0x20] sm:$0xff]
    %v80 = vld [vmem:[#allocation2 + $0x28] sm:$0xff]
    %v81 = vld [vmem:[#allocation2 + $0x30] sm:$0xff]
    %v82 = vld [vmem:[#allocation2 + $0x38] sm:$0xff]
    %v83 = vld [vmem:[#allocation2 + $0x40] sm:$0xff]
    %v84 = vld [vmem:[#allocation2 + $0x48] sm:$0xff]
    %v85 = vld [vmem:[#allocation2 + $0x50] sm:$0xff]
    %v86 = vld [vmem:[#allocation2 + $0x58] sm:$0xff]
    %v87 = vld [vmem:[#allocation2 + $0x60] sm:$0xff]
    %v88 = vld [vmem:[#allocation2 + $0x68] sm:$0xff]
    %v89 = vld [vmem:[#allocation2 + $0x70] sm:$0xff]
    %v90 = vld [vmem:[#allocation2 + $0x78] sm:$0xff]
    %91 = vmatpush.msra.mxu0 %v90
    %92 = vmatpush.msra.mxu0 %v89
    %93 = vmatpush.msra.mxu0 %v88
    %94 = vmatpush.msra.mxu0 %v87
    %95 = vmatpush.msra.mxu0 %v86
    %96 = vmatpush.msra.mxu0 %v85
    %97 = vmatpush.msra.mxu0 %v84
    %98 = vmatpush.msra.mxu0 %v83
    %99 = vmatpush.msra.mxu0 %v82
    %100 = vmatpush.msra.mxu0 %v81
    %101 = vmatpush.msra.mxu0 %v80
    %102 = vmatpush.msra.mxu0 %v79
    %103 = vmatpush.msra.mxu0 %v78
    %104 = vmatpush.msra.mxu0 %v77
    %105 = vmatpush.msra.mxu0 %v76
    %106 = vmatpush.msra.mxu0 %v75
    %107 = vmatmul.f32.gmra.mxu0 %v74
    %v108 = vpop.f32.mrf.mxu0
    %v109 = vadd.f32 0.0, %v108
    %110 = vdwg.mxu0
    %111 = vst [vmem:[#allocation9] sm:$0xff] %v109
    %v112 = vpack.c.bf16 %v109, %v109
    %v113 = vld [vmem:[#allocation5] sm:$0xf]
    %v114 = vld [vmem:[#allocation5 + $0x4] sm:$0xf]
    %v115 = vld [vmem:[#allocation5 + $0x8] sm:$0xf]
    %v116 = vld [vmem:[#allocation5 + $0xc] sm:$0xf]
    %v117 = vld [vmem:[#allocation5 + $0x10] sm:$0xf]
    %v118 = vld [vmem:[#allocation5 + $0x14] sm:$0xf]
    %v119 = vld [vmem:[#allocation5 + $0x18] sm:$0xf]
    %v120 = vld [vmem:[#allocation5 + $0x1c] sm:$0xf]
    %v121 = vld [vmem:[#allocation5 + $0x20] sm:$0xf]
    %v122 = vld [vmem:[#allocation5 + $0x24] sm:$0xf]
    %v123 = vld [vmem:[#allocation5 + $0x28] sm:$0xf]
    %v124 = vld [vmem:[#allocation5 + $0x2c] sm:$0xf]
    %v125 = vld [vmem:[#allocation5 + $0x30] sm:$0xf]
    %v126 = vld [vmem:[#allocation5 + $0x34] sm:$0xf]
    %v127 = vld [vmem:[#allocation5 + $0x38] sm:$0xf]
    %v128 = vld [vmem:[#allocation5 + $0x3c] sm:$0xf]
    %v145 = vunpack.c.l.b16 %v113
    %v146 = vunpack.c.l.b16 %v114
    %v147 = vunpack.c.l.b16 %v115
    %v148 = vunpack.c.l.b16 %v116
    %v149 = vunpack.c.l.b16 %v117
    %v150 = vunpack.c.l.b16 %v118
    %v151 = vunpack.c.l.b16 %v119
    %v152 = vunpack.c.l.b16 %v120
    %v153 = vunpack.c.l.b16 %v121
    %v154 = vunpack.c.l.b16 %v122
    %v155 = vunpack.c.l.b16 %v123
    %v156 = vunpack.c.l.b16 %v124
    %v157 = vunpack.c.l.b16 %v125
    %v158 = vunpack.c.l.b16 %v126
    %v159 = vunpack.c.l.b16 %v127
    %v160 = vunpack.c.l.b16 %v128
    %v161 = vpack.c.b16 %v146, %v145
    %v162 = vpack.c.b16 %v148, %v147
    %v163 = vpack.c.b16 %v150, %v149
    %v164 = vpack.c.b16 %v152, %v151
    %v165 = vpack.c.b16 %v154, %v153
    %v166 = vpack.c.b16 %v156, %v155
    %v167 = vpack.c.b16 %v158, %v157
    %v168 = vpack.c.b16 %v160, %v159
    %177 = vmatpush.bf16.msra.mxu0 %v168
    %178 = vmatpush.bf16.msra.mxu0 %v167
    %179 = vmatpush.bf16.msra.mxu0 %v166
    %180 = vmatpush.bf16.msra.mxu0 %v165
    %181 = vmatpush.bf16.msra.mxu0 %v164
    %182 = vmatpush.bf16.msra.mxu0 %v163
    %183 = vmatpush.bf16.msra.mxu0 %v162
    %184 = vmatpush.bf16.msra.mxu0 %v161
    %185 = vmatmul.bf16.gmra.mxu0 %v112
    %v186 = vpop.f32.mrf.mxu0
    %v187 = vadd.f32 0.0, %v186
    %v188 = vpop.f32.mrf.mxu0
    %189 = vdwg.mxu0
    %v190 = vrot.slane %v187, 4
    %v191 = vadd.f32 %v187, %v190
    %v192 = vrot.slane %v191, 2
    %v193 = vadd.f32 %v191, %v192
    %v194 = vrot.slane %v193, 1
    %v195 = vadd.f32 %v193, %v194
    %v196 = vmul.f32 %v187, %v187
    %v197 = vrot.slane %v196, 4
    %v198 = vadd.f32 %v196, %v197
    %v199 = vrot.slane %v198, 2
    %v200 = vadd.f32 %v198, %v199
    %v201 = vrot.slane %v200, 1
    %v202 = vadd.f32 %v200, %v201
    %v203 = vmul.f32 %v195, 0.125
    %v204 = vmul.f32 %v202, 0.125
    %v205 = vmul.f32 %v203, %v203
    %v206 = vsub.f32 %v204, %v205
    %v207 = vadd.f32 %v206, 1e-05
    %v208 = vrsqrt.pop %v207
    %v209 = vmul.f32 %v208, %v207
    %v210 = vmul.f32 %v209, %v208
    %v211 = vmul.f32 0.5, %v210
    %v212 = vsub.f32 1.5, %v211
    %v213 = vmul.f32 %v208, %v212
    %vm214 = vweird.f32 %v207
    %vm215 = vweird.f32 %v208
    %vm216 = vmor %vm214, %vm215
    %v217 = vsel %vm216, %v208, %v213
    %v218 = vld [vmem:[%s3] sm:$0x1]
    %v219 = vmul.f32 %v217, %v218
    %v220 = vsub.f32 %v187, %v203
    %v221 = vperm.slane %v219, 0
    %v222 = vmul.f32 %v220, %v221
    %v223 = vld [vmem:[%s4] sm:$0x1]
    %v225 = vperm.slane %v223, 0
    %v227 = vadd.f32 %v222, %v225
    %v228 = vmax.f32 %v227, 0.0
    %v229 = vpack.c.bf16 %v228, %v228
    %v230 = vld [vmem:[#allocation7] sm:$0xf]
    %v231 = vld [vmem:[#allocation7 + $0x4] sm:$0xf]
    %v232 = vld [vmem:[#allocation7 + $0x8] sm:$0xf]
    %v233 = vld [vmem:[#allocation7 + $0xc] sm:$0xf]
    %v234 = vld [vmem:[#allocation7 + $0x10] sm:$0xf]
    %v235 = vld [vmem:[#allocation7 + $0x14] sm:$0xf]
    %v236 = vld [vmem:[#allocation7 + $0x18] sm:$0xf]
    %v237 = vld [vmem:[#allocation7 + $0x1c] sm:$0xf]
    %v238 = vld [vmem:[#allocation7 + $0x20] sm:$0xf]
    %v239 = vld [vmem:[#allocation7 + $0x24] sm:$0xf]
    %v240 = vld [vmem:[#allocation7 + $0x28] sm:$0xf]
    %v241 = vld [vmem:[#allocation7 + $0x2c] sm:$0xf]
    %v242 = vld [vmem:[#allocation7 + $0x30] sm:$0xf]
    %v243 = vld [vmem:[#allocation7 + $0x34] sm:$0xf]
    %v244 = vld [vmem:[#allocation7 + $0x38] sm:$0xf]
    %v245 = vld [vmem:[#allocation7 + $0x3c] sm:$0xf]
    %v262 = vunpack.c.l.b16 %v230
    %v263 = vunpack.c.l.b16 %v231
    %v264 = vunpack.c.l.b16 %v232
    %v265 = vunpack.c.l.b16 %v233
    %v266 = vunpack.c.l.b16 %v234
    %v267 = vunpack.c.l.b16 %v235
    %v268 = vunpack.c.l.b16 %v236
    %v269 = vunpack.c.l.b16 %v237
    %v270 = vunpack.c.l.b16 %v238
    %v271 = vunpack.c.l.b16 %v239
    %v272 = vunpack.c.l.b16 %v240
    %v273 = vunpack.c.l.b16 %v241
    %v274 = vunpack.c.l.b16 %v242
    %v275 = vunpack.c.l.b16 %v243
    %v276 = vunpack.c.l.b16 %v244
    %v277 = vunpack.c.l.b16 %v245
    %v278 = vpack.c.b16 %v263, %v262
    %v279 = vpack.c.b16 %v265, %v264
    %v280 = vpack.c.b16 %v267, %v266
    %v281 = vpack.c.b16 %v269, %v268
    %v282 = vpack.c.b16 %v271, %v270
    %v283 = vpack.c.b16 %v273, %v272
    %v284 = vpack.c.b16 %v275, %v274
    %v285 = vpack.c.b16 %v277, %v276
    %294 = vmatpush.bf16.msra.mxu0 %v285
    %295 = vmatpush.bf16.msra.mxu0 %v284
    %296 = vmatpush.bf16.msra.mxu0 %v283
    %297 = vmatpush.bf16.msra.mxu0 %v282
    %298 = vmatpush.bf16.msra.mxu0 %v281
    %299 = vmatpush.bf16.msra.mxu0 %v280
    %300 = vmatpush.bf16.msra.mxu0 %v279
    %301 = vmatpush.bf16.msra.mxu0 %v278
    %302 = vmatmul.bf16.gmra.mxu0 %v229
    %v303 = vpop.f32.mrf.mxu0
    %v304 = vadd.f32 0.0, %v303
    %v305 = vpop.f32.mrf.mxu0
    %306 = vdwg.mxu0
    %v307 = vrot.slane %v304, 4
    %v308 = vadd.f32 %v304, %v307
    %v309 = vrot.slane %v308, 2
    %v310 = vadd.f32 %v308, %v309
    %v311 = vrot.slane %v310, 1
    %v312 = vadd.f32 %v310, %v311
    %v313 = vmul.f32 %v304, %v304
    %v314 = vrot.slane %v313, 4
    %v315 = vadd.f32 %v313, %v314
    %v316 = vrot.slane %v315, 2
    %v317 = vadd.f32 %v315, %v316
    %v318 = vrot.slane %v317, 1
    %v319 = vadd.f32 %v317, %v318
    %v320 = vmul.f32 %v312, 0.125
    %v321 = vmul.f32 %v319, 0.125
    %v322 = vmul.f32 %v320, %v320
    %v323 = vsub.f32 %v321, %v322
    %v324 = vsub.f32 %v304, %v320
    %v325 = vadd.f32 %v323, 1e-05
    %v326 = vrsqrt.pop %v325
    %v327 = vmul.f32 %v326, %v325
    %v328 = vmul.f32 %v327, %v326
    %v329 = vmul.f32 0.5, %v328
    %v330 = vsub.f32 1.5, %v329
    %v331 = vmul.f32 %v326, %v330
    %vm332 = vweird.f32 %v325
    %vm333 = vweird.f32 %v326
    %vm334 = vmor %vm332, %vm333
    %v335 = vsel %vm334, %v326, %v331
    %v336 = vmul.f32 %v324, %v335
    %337 = vst [vmem:[#allocation8] sm:$0xff] %v336
    // Predicated region
    $region38: #{forward.1} parent=1 // pred_check
      _
    $region39: #{forward.1} parent=1 // pred_check_branch
      %339 = sbr.rel (0) target = $region41
    $region40: #{forward.1} parent=1 // pred_region
      %341 = vsyncadd [#allocation4], 0
      %s343 = sshll.u32 [#allocation8], 4
      %s344 = int_to_ptr.vmem [resolvable:$true] %s343
      %s345 = sshll.u32 %s6, 4
      %s346 = int_to_ptr.hbm [resolvable:$true] %s345
      %348 = dma.vmem_to_hbm [thread:$0]  %s344, 128, %s346, [#allocation4]
    $region41: #{forward.1} parent=1 // pred_fallthru
      _
    // Predicated region
    $region42: #{forward.1} parent=1 // pred_check
      _
    $region43: #{forward.1} parent=1 // pred_check_branch
      %350 = sbr.rel (0) target = $region45
    $region44: #{forward.1} parent=1 // pred_region
      %352 = vsyncadd [#allocation10], 0
      %s354 = sshll.u32 [#allocation9], 4
      %s355 = int_to_ptr.vmem [resolvable:$true] %s354
      %s356 = sshll.u32 %s7, 4
      %s357 = int_to_ptr.hbm [resolvable:$true] %s356
      %359 = dma.vmem_to_hbm [thread:$0]  %s355, 128, %s357, [#allocation10]
    $region45: #{forward.1} parent=1 // pred_fallthru
      _
    // Predicated region
    $region46: #{forward.1} parent=1 // pred_check
      _
    $region47: #{forward.1} parent=1 // pred_check_branch
      %361 = sbr.rel (0) target = $region49
    $region48: #{forward.1} parent=1 // pred_region
      %363 = dma.done [#allocation4], 128
    $region49: #{forward.1} parent=1 // pred_fallthru
      _
    // Predicated region
    $region50: #{forward.1} parent=1 // pred_check
      _
    $region51: #{forward.1} parent=1 // pred_check_branch
      %365 = sbr.rel (0) target = $region53
    $region52: #{forward.1} parent=1 // pred_region
      %367 = dma.done [#allocation10], 128
    $region53: #{forward.1} parent=1 // pred_fallthru
      _
    %368 = vsyncpa [#allocation3], 1
    %369 = vsyncpa [#allocation6], 1
    %370 = vsyncpa [#allocation4], 1
    %371 = vsyncpa [#allocation10], 1

</llo_original>
